<compile_context>
chip_gen: v5e
topology: v5e:2x2
jax: 0.10.0
libtpu: 0.0.40
codegen_flags: <defaults>
</compile_context>

<pallas_src>
import functools
import math

import jax
import jax.numpy as jnp
from jax.experimental import pallas as pl
from jax.experimental.pallas import tpu as pltpu


def _round_up(x, m):
    return (x + m - 1) // m * m


def _largest_divisor_tile(total, unit, target):
    """Largest multiple of `unit` that divides `total`, capped at `target`."""
    best = unit
    m = unit
    cap = min(total, max(target, unit))
    while m <= cap:
        if total % m == 0:
            best = m
        m += unit
    return best


# ---------------------------------------------------------------------------
# Pass 1 (materialized path): streamed logits + online logsumexp
#   grid = (row_tiles, vocab_tiles); vocab innermost ("arbitrary")
# ---------------------------------------------------------------------------
def _logits_lse_kernel(x_ref, wt_ref, b_ref, logits_ref, lse_ref, m_sc, l_sc):
    j = pl.program_id(1)

    @pl.when(j == 0)
    def _():
        m_sc[...] = jnp.full_like(m_sc, -jnp.inf)
        l_sc[...] = jnp.zeros_like(l_sc)

    # bf16 (or f32) operands, f32 accumulation on the MXU.
    logits = jnp.dot(x_ref[...], wt_ref[...], preferred_element_type=jnp.float32)
    logits = logits + b_ref[...]  # bias tile is f32

    # Online logsumexp (all statistics in f32; EUP/XLU work, off the MXU path).
    m_prev = m_sc[...]
    m_new = jnp.maximum(m_prev, jnp.max(logits, axis=-1, keepdims=True))
    alpha = jnp.exp(m_prev - m_new)
    l_sc[...] = alpha * l_sc[...] + jnp.sum(jnp.exp(logits - m_new), axis=-1,
                                            keepdims=True)
    m_sc[...] = m_new

    logits_ref[...] = logits.astype(logits_ref.dtype)

    @pl.when(j == pl.num_programs(1) - 1)
    def _():
        lse_ref[...] = m_sc[...] + jnp.log(l_sc[...])


# ---------------------------------------------------------------------------
# Pass A (recompute path): online logsumexp only (no logits written to HBM)
# ---------------------------------------------------------------------------
def _lse_only_kernel(x_ref, wt_ref, b_ref, lse_ref, m_sc, l_sc):
    j = pl.program_id(1)

    @pl.when(j == 0)
    def _():
        m_sc[...] = jnp.full_like(m_sc, -jnp.inf)
        l_sc[...] = jnp.zeros_like(l_sc)

    logits = jnp.dot(x_ref[...], wt_ref[...], preferred_element_type=jnp.float32)
    logits = logits + b_ref[...]

    m_prev = m_sc[...]
    m_new = jnp.maximum(m_prev, jnp.max(logits, axis=-1, keepdims=True))
    alpha = jnp.exp(m_prev - m_new)
    l_sc[...] = alpha * l_sc[...] + jnp.sum(jnp.exp(logits - m_new), axis=-1,
                                            keepdims=True)
    m_sc[...] = m_new

    @pl.when(j == pl.num_programs(1) - 1)
    def _():
        lse_ref[...] = m_sc[...] + jnp.log(l_sc[...])


# ---------------------------------------------------------------------------
# Pass 2 (materialized path): elementwise normalization  out = logits - lse
# ---------------------------------------------------------------------------
def _normalize_kernel(logits_ref, lse_ref, o_ref):
    o_ref[...] = (logits_ref[...].astype(jnp.float32) - lse_ref[...]).astype(o_ref.dtype)


# ---------------------------------------------------------------------------
# Pass B (recompute path): redo matmul and write normalized output directly
# ---------------------------------------------------------------------------
def _recompute_normalize_kernel(x_ref, wt_ref, b_ref, lse_ref, o_ref):
    logits = jnp.dot(x_ref[...], wt_ref[...], preferred_element_type=jnp.float32)
    logits = logits + b_ref[...]
    o_ref[...] = (logits - lse_ref[...]).astype(o_ref.dtype)


def projection_layer(x, w_t, bias, *,
                     tile_rows=512, tile_vocab=2048,
                     compute_dtype=jnp.bfloat16,   # MXU operands (accumulation stays f32)
                     logits_dtype=jnp.float32,     # HBM logits intermediate (materialized path)
                     out_dtype=None,
                     materialize_logits=None,      # None = auto-select from traffic model
                     vmem_limit_bytes=None):
    """log_softmax(x @ w_t + bias, axis=-1).

    x:    (B, S, d_model)
    w_t:  (d_model, vocab)   -- PyTorch weight (vocab, d_model) transposed ONCE at init
    bias: (vocab,)
    """
    B, S, d_model = x.shape
    d2, vocab = w_t.shape
    assert d2 == d_model, "w_t must be (d_model, vocab)"
    out_dtype = jnp.dtype(out_dtype or x.dtype)
    compute_dtype = jnp.dtype(compute_dtype)
    logits_dtype = jnp.dtype(logits_dtype)

    # ----- generation-aware VMEM budget (v5e/v6e ~96 MiB, v7x ~48 MiB) -----
    if vmem_limit_bytes is None:
        try:
            cap = int(pltpu.get_tpu_info().vmem_capacity_bytes)
        except Exception:
            cap = 64 * 1024 * 1024
        vmem_limit_bytes = min((cap * 3) // 4, 100 * 1024 * 1024)

    rows = B * S
    x2d = x.reshape(rows, d_model)

    # ----- row tiling (pad instead of asserting divisibility) -----
    tm = _round_up(min(tile_rows, _round_up(rows, 8)), 8)
    # keep at least 2 row tiles so the "parallel" rows axis feeds both v7x TensorCores
    if rows > 8 and _round_up(rows, tm) // tm < 2:
        tm = _round_up(-(-rows // 2), 8)

    # ----- vocab tiling: sized from d_model and the VMEM budget -----
    xw_bytes = compute_dtype.itemsize
    max_tv = int((0.40 * vmem_limit_bytes) // max(1, 2 * d_model * xw_bytes))
    max_tv = max(128, (max_tv // 128) * 128)
    tv = _round_up(min(tile_vocab, max_tv, _round_up(vocab, 128)), 128)

    def _vmem_est(tm_, tv_):
        return (2 * tm_ * d_model * xw_bytes                     # x tile (double-buffered)
                + 2 * d_model * tv_ * xw_bytes                   # weight tile
                + 2 * tv_ * 4                                    # bias tile
                + 2 * tm_ * tv_ * max(logits_dtype.itemsize, out_dtype.itemsize)
                + 4 * tm_ * 4)                                   # lse out + scratch

    while _vmem_est(tm, tv) > 0.85 * vmem_limit_bytes and tv > 128:
        tv = max(128, _round_up(tv // 2, 128))
    while _vmem_est(tm, tv) > 0.85 * vmem_limit_bytes and tm > 8:
        tm = max(8, _round_up(tm // 2, 8))

    rows_p = _round_up(rows, tm)
    vocab_p = _round_up(vocab, tv)
    nr = rows_p // tm
    nv = vocab_p // tv

    if rows_p != rows:
        x2d = jnp.pad(x2d, ((0, rows_p - rows), (0, 0)))
    if vocab_p != vocab:
        # zero weight columns + very negative bias => padded logits contribute
        # exp(~-1e30) == 0 to the logsumexp.
        w_t = jnp.pad(w_t, ((0, 0), (0, vocab_p - vocab)))
        bias = jnp.pad(bias, (0, vocab_p - vocab), constant_values=-1e30)

    x2d = x2d.astype(compute_dtype)
    w_t = w_t.astype(compute_dtype)
    b2d = bias.reshape(1, vocab_p).astype(jnp.float32)

    # ----- recompute vs. materialize decision (HBM traffic model) -----
    if materialize_logits is None:
        extra_weight_sweep = nr * d_model * vocab_p * xw_bytes
        logits_roundtrip = 2 * rows_p * vocab_p * logits_dtype.itemsize
        materialize_logits = extra_weight_sweep >= logits_roundtrip

    # ----- shared specs -----
    x_spec = pl.BlockSpec((tm, d_model), lambda i, j: (i, 0))     # resident per vocab sweep
    w_spec = pl.BlockSpec((d_model, tv), lambda i, j: (0, j))     # streamed
    b_spec = pl.BlockSpec((1, tv), lambda i, j: (0, j))
    lse_spec = pl.BlockSpec((tm, 1), lambda i, j: (i, 0))
    tile_spec = pl.BlockSpec((tm, tv), lambda i, j: (i, j))
    scratch = [pltpu.VMEM((tm, 1), jnp.float32),                  # running max
               pltpu.VMEM((tm, 1), jnp.float32)]                  # running sum-exp

    matmul_flops = 2 * rows_p * d_model * vocab_p
    weight_bytes = nr * d_model * vocab_p * xw_bytes
    x_bytes_total = rows_p * d_model * xw_bytes

    cparams_mm = pltpu.CompilerParams(
        dimension_semantics=("parallel", "arbitrary"),
        vmem_limit_bytes=vmem_limit_bytes,
    )

    if materialize_logits:
        cost1 = pl.CostEstimate(
            flops=int(matmul_flops),
            transcendentals=int(rows_p * vocab_p),
            bytes_accessed=int(x_bytes_total + weight_bytes
                               + rows_p * vocab_p * logits_dtype.itemsize + rows_p * 4),
        )
        logits, lse = pl.pallas_call(
            _logits_lse_kernel,
            out_shape=(jax.ShapeDtypeStruct((rows_p, vocab_p), logits_dtype),
                       jax.ShapeDtypeStruct((rows_p, 1), jnp.float32)),
            grid_spec=pltpu.PrefetchScalarGridSpec(
                num_scalar_prefetch=0, grid=(nr, nv),
                in_specs=[x_spec, w_spec, b_spec],
                out_specs=(tile_spec, lse_spec),
                scratch_shapes=scratch),
            compiler_params=cparams_mm,
            cost_estimate=cost1,
        )(x2d, w_t, b2d)

        # Pass 2: pure HBM streaming with its own larger tiles; alias out onto logits.
        tm2 = _largest_divisor_tile(rows_p, 8, max(512, tm))
        tv2 = _largest_divisor_tile(vocab_p, 128, max(2048, tv))
        cost2 = pl.CostEstimate(
            flops=int(rows_p * vocab_p),
            transcendentals=0,
            bytes_accessed=int(rows_p * vocab_p * (logits_dtype.itemsize + out_dtype.itemsize)
                               + rows_p * 4),
        )
        alias = {0: 0} if logits_dtype == out_dtype else {}
        out2d = pl.pallas_call(
            _normalize_kernel,
            out_shape=jax.ShapeDtypeStruct((rows_p, vocab_p), out_dtype),
            grid_spec=pltpu.PrefetchScalarGridSpec(
                num_scalar_prefetch=0, grid=(rows_p // tm2, vocab_p // tv2),
                in_specs=[pl.BlockSpec((tm2, tv2), lambda i, j: (i, j)),
                          pl.BlockSpec((tm2, 1), lambda i, j: (i, 0))],
                out_specs=pl.BlockSpec((tm2, tv2), lambda i, j: (i, j))),
            compiler_params=pltpu.CompilerParams(
                dimension_semantics=("parallel", "parallel"),
                vmem_limit_bytes=vmem_limit_bytes),
            cost_estimate=cost2,
            input_output_aliases=alias,
        )(logits, lse)
    else:
        # Sweep 1: LSE only.
        cost_a = pl.CostEstimate(
            flops=int(matmul_flops),
            transcendentals=int(rows_p * vocab_p),
            bytes_accessed=int(x_bytes_total + weight_bytes + rows_p * 4),
        )
        lse = pl.pallas_call(
            _lse_only_kernel,
            out_shape=jax.ShapeDtypeStruct((rows_p, 1), jnp.float32),
            grid_spec=pltpu.PrefetchScalarGridSpec(
                num_scalar_prefetch=0, grid=(nr, nv),
                in_specs=[x_spec, w_spec, b_spec],
                out_specs=lse_spec,
                scratch_shapes=scratch),
            compiler_params=cparams_mm,
            cost_estimate=cost_a,
        )(x2d, w_t, b2d)

        # Sweep 2: recompute the matmul and write normalized output directly.
        cost_b = pl.CostEstimate(
            flops=int(matmul_flops + rows_p * vocab_p),
            transcendentals=0,
            bytes_accessed=int(x_bytes_total + weight_bytes + rows_p * 4
                               + rows_p * vocab_p * out_dtype.itemsize),
        )
        out2d = pl.pallas_call(
            _recompute_normalize_kernel,
            out_shape=jax.ShapeDtypeStruct((rows_p, vocab_p), out_dtype),
            grid_spec=pltpu.PrefetchScalarGridSpec(
                num_scalar_prefetch=0, grid=(nr, nv),
                in_specs=[x_spec, w_spec, b_spec, lse_spec],
                out_specs=tile_spec),
            compiler_params=pltpu.CompilerParams(
                dimension_semantics=("parallel", "parallel"),
                vmem_limit_bytes=vmem_limit_bytes),
            cost_estimate=cost_b,
        )(x2d, w_t, b2d, lse)

    return out2d[:rows, :vocab].reshape(B, S, vocab)


if __name__ == "__main__":
    def run_case(batch, seq, d_model, vocab_size, *, key, tol, **kwargs):
        kx, kw, kb = jax.random.split(key, 3)
        bound = 1.0 / math.sqrt(d_model)
        # nn.Linear-style init, PyTorch layout (vocab, d_model)
        weight = jax.random.uniform(kw, (vocab_size, d_model), minval=-bound,
                                    maxval=bound, dtype=jnp.float32)
        bias = jax.random.uniform(kb, (vocab_size,), minval=-bound,
                                  maxval=bound, dtype=jnp.float32)
        x = jax.random.normal(kx, (batch, seq, d_model), dtype=jnp.float32)

        # One-time layout conversion outside the hot path (no per-call transpose).
        w_t = weight.T

        fn = jax.jit(functools.partial(projection_layer, **kwargs))
        out = jax.block_until_ready(fn(x, w_t, bias))

        ref = jax.nn.log_softmax(
            jnp.dot(x, weight.T, precision=jax.lax.Precision.HIGHEST) + bias, axis=-1)
        assert out.shape == (batch, seq, vocab_size)
        err = float(jnp.max(jnp.abs(out.astype(jnp.float32) - ref)))
        assert err < tol, f"max abs err {err} >= {tol}"

    key = jax.random.PRNGKey(0)
    k1, k2, k3 = jax.random.split(key, 3)

    # 1) f32 operands, 4 vocab tiles x 2 row tiles -> exercises the online logsumexp
    #    and the materialized two-pass (+ in-place aliased normalization) path.
    run_case(2, 8, 32, 512, key=k1, tol=2e-4,
             tile_rows=256, tile_vocab=128,
             compute_dtype=jnp.float32, materialize_logits=True)
    # 2) f32 operands, ragged rows/vocab -> exercises padding + the recompute path
    #    (no logits ever materialized in HBM).
    run_case(2, 7, 32, 130, key=k2, tol=2e-4,
             tile_rows=256, tile_vocab=128,
             compute_dtype=jnp.float32, materialize_logits=False)
    # 3) Default hot-path config: bf16 MXU operands with f32 accumulation/statistics;
    #    accuracy bounded by bf16 operand rounding, hence the loose tolerance.
    run_case(2, 8, 32, 512, key=k3, tol=1e-1)

    print("KERNEL_OK")
</pallas_src>

<mosaic_0001>
module attributes {stable_mosaic.version = 11 : i64} {
  func.func @_logits_lse_kernel(%arg0: i32, %arg1: i32, %arg2: memref<8x32xf32, #tpu.memory_space<vmem>>, %arg3: memref<32x128xf32, #tpu.memory_space<vmem>>, %arg4: memref<1x128xf32, #tpu.memory_space<vmem>>, %arg5: memref<8x128xf32, #tpu.memory_space<vmem>>, %arg6: memref<8x1xf32, #tpu.memory_space<vmem>>, %arg7: memref<8x1xf32, #tpu.memory_space<vmem>>, %arg8: memref<8x1xf32, #tpu.memory_space<vmem>>) attributes {dimension_semantics = [#tpu.dimension_semantics<parallel>, #tpu.dimension_semantics<arbitrary>], iteration_bounds = array<i64: 2, 4>, scalar_prefetch = 0 : i64, scratch_operands = 2 : i64, tpu.core_type = #tpu.core_type<tc>, window_params = [{transform_indices = @transform_0, window_bounds = array<i64: 8, 32>}, {transform_indices = @transform_1, window_bounds = array<i64: 32, 128>}, {transform_indices = @transform_2, window_bounds = array<i64: 1, 128>}, {transform_indices = @transform_3, window_bounds = array<i64: 8, 128>}, {transform_indices = @transform_4, window_bounds = array<i64: 8, 1>}]} {
    %c0_i32 = arith.constant 0 : i32
    %0 = arith.cmpi eq, %arg1, %c0_i32 : i32
    %1 = arith.extui %0 : i1 to i32
    %c0_i32_0 = arith.constant 0 : i32
    %2 = arith.cmpi ne, %1, %c0_i32_0 : i32
    scf.if %2 {
      %cst_19 = arith.constant 0xFF800000 : f32
      %29 = vector.broadcast %cst_19 : f32 to vector<8x1xf32>
      %c0_20 = arith.constant 0 : index
      %c0_21 = arith.constant 0 : index
      %30 = vector.load %arg7[%c0_20, %c0_21] : memref<8x1xf32, #tpu.memory_space<vmem>>, vector<8x1xf32>
      tpu.vector_store %arg7[%c0_20, %c0_21], %29 {strides = array<i32>} : memref<8x1xf32, #tpu.memory_space<vmem>>, vector<8x1xf32>,
      %cst_22 = arith.constant 0.000000e+00 : f32
      %31 = vector.broadcast %cst_22 : f32 to vector<8x1xf32>
      %c0_23 = arith.constant 0 : index
      %c0_24 = arith.constant 0 : index
      %32 = vector.load %arg8[%c0_23, %c0_24] : memref<8x1xf32, #tpu.memory_space<vmem>>, vector<8x1xf32>
      tpu.vector_store %arg8[%c0_23, %c0_24], %31 {strides = array<i32>} : memref<8x1xf32, #tpu.memory_space<vmem>>, vector<8x1xf32>,
    } else {
    }
    %c0 = arith.constant 0 : index
    %c0_1 = arith.constant 0 : index
    %3 = vector.load %arg2[%c0, %c0_1] : memref<8x32xf32, #tpu.memory_space<vmem>>, vector<8x32xf32>
    %c0_2 = arith.constant 0 : index
    %c0_3 = arith.constant 0 : index
    %4 = vector.load %arg3[%c0_2, %c0_3] : memref<32x128xf32, #tpu.memory_space<vmem>>, vector<32x128xf32>
    %cst = arith.constant dense<0.000000e+00> : vector<8x128xf32>
    %5 = tpu.matmul %3, %4, %cst {dimension_numbers = #tpu.dot_dimension_numbers<[1], [0], [0], [1], [0, 0, 1, 1], [], []>} : vector<8x32xf32>, vector<32x128xf32>, vector<8x128xf32> -> vector<8x128xf32>
    %c0_4 = arith.constant 0 : index
    %c0_5 = arith.constant 0 : index
    %6 = vector.load %arg4[%c0_4, %c0_5] : memref<1x128xf32, #tpu.memory_space<vmem>>, vector<1x128xf32>
    %7 = vector.broadcast %6 : vector<1x128xf32> to vector<8x128xf32>
    %8 = arith.addf %5, %7 : vector<8x128xf32>
    %c0_6 = arith.constant 0 : index
    %c0_7 = arith.constant 0 : index
    %9 = vector.load %arg7[%c0_6, %c0_7] : memref<8x1xf32, #tpu.memory_space<vmem>>, vector<8x1xf32>
    %cst_8 = arith.constant dense<0xFF800000> : vector<8xf32>
    %10 = vector.multi_reduction <maximumf>, %8, %cst_8 [1] : vector<8x128xf32> to vector<8xf32>
    %11 = vector.shape_cast %10 : vector<8xf32> to vector<8x1xf32>
    %12 = arith.maximumf %9, %11 : vector<8x1xf32>
    %13 = arith.subf %9, %12 : vector<8x1xf32>
    %14 = math.exp %13 : vector<8x1xf32>
    %c0_9 = arith.constant 0 : index
    %c0_10 = arith.constant 0 : index
    %15 = vector.load %arg8[%c0_9, %c0_10] : memref<8x1xf32, #tpu.memory_space<vmem>>, vector<8x1xf32>
    %16 = arith.mulf %14, %15 : vector<8x1xf32>
    %17 = vector.broadcast %12 : vector<8x1xf32> to vector<8x128xf32>
    %18 = arith.subf %8, %17 : vector<8x128xf32>
    %19 = math.exp %18 : vector<8x128xf32>
    %cst_11 = arith.constant dense<0.000000e+00> : vector<8xf32>
    %20 = vector.multi_reduction <add>, %19, %cst_11 [1] : vector<8x128xf32> to vector<8xf32>
    %21 = vector.shape_cast %20 : vector<8xf32> to vector<8x1xf32>
    %22 = arith.addf %16, %21 : vector<8x1xf32>
    %c0_12 = arith.constant 0 : index
    %c0_13 = arith.constant 0 : index
    %23 = vector.load %arg8[%c0_12, %c0_13] : memref<8x1xf32, #tpu.memory_space<vmem>>, vector<8x1xf32>
    tpu.vector_store %arg8[%c0_12, %c0_13], %22 {strides = array<i32>} : memref<8x1xf32, #tpu.memory_space<vmem>>, vector<8x1xf32>,
    %c0_14 = arith.constant 0 : index
    %c0_15 = arith.constant 0 : index
    %24 = vector.load %arg7[%c0_14, %c0_15] : memref<8x1xf32, #tpu.memory_space<vmem>>, vector<8x1xf32>
    tpu.vector_store %arg7[%c0_14, %c0_15], %12 {strides = array<i32>} : memref<8x1xf32, #tpu.memory_space<vmem>>, vector<8x1xf32>,
    %c0_16 = arith.constant 0 : index
    %c0_17 = arith.constant 0 : index
    %25 = vector.load %arg5[%c0_16, %c0_17] : memref<8x128xf32, #tpu.memory_space<vmem>>, vector<8x128xf32>
    tpu.vector_store %arg5[%c0_16, %c0_17], %8 {strides = array<i32>} : memref<8x128xf32, #tpu.memory_space<vmem>>, vector<8x128xf32>,
    %c3_i32 = arith.constant 3 : i32
    %26 = arith.cmpi eq, %arg1, %c3_i32 : i32
    %27 = arith.extui %26 : i1 to i32
    %c0_i32_18 = arith.constant 0 : i32
    %28 = arith.cmpi ne, %27, %c0_i32_18 : i32
    scf.if %28 {
      %c0_19 = arith.constant 0 : index
      %c0_20 = arith.constant 0 : index
      %29 = vector.load %arg7[%c0_19, %c0_20] : memref<8x1xf32, #tpu.memory_space<vmem>>, vector<8x1xf32>
      %c0_21 = arith.constant 0 : index
      %c0_22 = arith.constant 0 : index
      %30 = vector.load %arg8[%c0_21, %c0_22] : memref<8x1xf32, #tpu.memory_space<vmem>>, vector<8x1xf32>
      %31 = math.log %30 : vector<8x1xf32>
      %32 = arith.addf %29, %31 : vector<8x1xf32>
      %c0_23 = arith.constant 0 : index
      %c0_24 = arith.constant 0 : index
      %33 = vector.load %arg6[%c0_23, %c0_24] : memref<8x1xf32, #tpu.memory_space<vmem>>, vector<8x1xf32>
      tpu.vector_store %arg6[%c0_23, %c0_24], %32 {strides = array<i32>} : memref<8x1xf32, #tpu.memory_space<vmem>>, vector<8x1xf32>,
    } else {
    }
    return
  }
  func.func @transform_0(%arg0: i32, %arg1: i32) -> (i32, i32) {
    %c0_i32 = arith.constant 0 : i32
    %c0_i32_0 = arith.constant 0 : i32
    return %arg0, %c0_i32 : i32, i32
  }
  func.func @transform_1(%arg0: i32, %arg1: i32) -> (i32, i32) {
    %c0_i32 = arith.constant 0 : i32
    %c0_i32_0 = arith.constant 0 : i32
    return %c0_i32, %arg1 : i32, i32
  }
  func.func @transform_2(%arg0: i32, %arg1: i32) -> (i32, i32) {
    %c0_i32 = arith.constant 0 : i32
    %c0_i32_0 = arith.constant 0 : i32
    return %c0_i32, %arg1 : i32, i32
  }
  func.func @transform_3(%arg0: i32, %arg1: i32) -> (i32, i32) {
    %c0_i32 = arith.constant 0 : i32
    return %arg0, %arg1 : i32, i32
  }
  func.func @transform_4(%arg0: i32, %arg1: i32) -> (i32, i32) {
    %c0_i32 = arith.constant 0 : i32
    %c0_i32_0 = arith.constant 0 : i32
    return %arg0, %c0_i32 : i32, i32
  }
}

module attributes {stable_mosaic.version = 11 : i64} {
  func.func @_normalize_kernel(%arg0: i32, %arg1: i32, %arg2: memref<16x512xf32, #tpu.memory_space<vmem>>, %arg3: memref<16x1xf32, #tpu.memory_space<vmem>>, %arg4: memref<16x512xf32, #tpu.memory_space<vmem>>) attributes {dimension_semantics = [#tpu.dimension_semantics<parallel>, #tpu.dimension_semantics<parallel>], iteration_bounds = array<i64: 1, 1>, scalar_prefetch = 0 : i64, scratch_operands = 0 : i64, tpu.core_type = #tpu.core_type<tc>, window_params = [{transform_indices = @transform_0, window_bounds = array<i64: 16, 512>}, {transform_indices = @transform_1, window_bounds = array<i64: 16, 1>}, {transform_indices = @transform_2, window_bounds = array<i64: 16, 512>}]} {
    %c0 = arith.constant 0 : index
    %c0_0 = arith.constant 0 : index
    %0 = vector.load %arg2[%c0, %c0_0] : memref<16x512xf32, #tpu.memory_space<vmem>>, vector<16x512xf32>
    %c0_1 = arith.constant 0 : index
    %c0_2 = arith.constant 0 : index
    %1 = vector.load %arg3[%c0_1, %c0_2] : memref<16x1xf32, #tpu.memory_space<vmem>>, vector<16x1xf32>
    %2 = vector.broadcast %1 : vector<16x1xf32> to vector<16x512xf32>
    %3 = arith.subf %0, %2 : vector<16x512xf32>
    %c0_3 = arith.constant 0 : index
    %c0_4 = arith.constant 0 : index
    %4 = vector.load %arg4[%c0_3, %c0_4] : memref<16x512xf32, #tpu.memory_space<vmem>>, vector<16x512xf32>
    tpu.vector_store %arg4[%c0_3, %c0_4], %3 {strides = array<i32>} : memref<16x512xf32, #tpu.memory_space<vmem>>, vector<16x512xf32>,
    return
  }
  func.func @transform_0(%arg0: i32, %arg1: i32) -> (i32, i32) {
    %c0_i32 = arith.constant 0 : i32
    return %arg0, %arg1 : i32, i32
  }
  func.func @transform_1(%arg0: i32, %arg1: i32) -> (i32, i32) {
    %c0_i32 = arith.constant 0 : i32
    %c0_i32_0 = arith.constant 0 : i32
    return %arg0, %c0_i32 : i32, i32
  }
  func.func @transform_2(%arg0: i32, %arg1: i32) -> (i32, i32) {
    %c0_i32 = arith.constant 0 : i32
    return %arg0, %arg1 : i32, i32
  }
}

</mosaic_0001>

<llo_original>
// kernel: projection_layer.2
$region0: #{projection_layer.2}
  #allocation0 [shape = 'u32[]', space=smem, size = 0x4, offset = 0x4, fixed_abs, tag = 'smem constant byte address 0x4 - core index']
  #allocation1 [shape = 'u32[72,128]{1,0:T(1,128)}', space=vmem, size = 0x9000, scoped, tag = 'internal scratch']
  #allocation2 [shape = 'f32[8,1]{1,0:T(8,128)}', space=vmem, size = 0x1000, scoped, tag = 'scratch operand']
  #allocation3 [shape = 'f32[8,1]{1,0:T(8,128)}', space=vmem, size = 0x1000, scoped, tag = 'scratch operand']
  %s0 = inlined_call_operand.hbm [shape: f32[16,32], index: 0, kind: input, shape index: {}]
  %s1 = inlined_call_operand.hbm [shape: f32[32,512], index: 1, kind: input, shape index: {}]
  %s2 = inlined_call_operand.hbm [shape: f32[1,512], index: 2, kind: input, shape index: {}]
  %s3 = inlined_call_operand.vmem [shape: f32[16,512], index: 3, kind: output, shape index: {0}]
  %s4 = inlined_call_operand.vmem [shape: f32[16,1], index: 4, kind: output, shape index: {1}]
  %5 = xla_tuple %s3, %s4
  %s6 = sld [smem:[#allocation0]]
  $region73: #{projection_layer.2} parent=0
    _
  %s8 = ssub.s32 1, %s6
  %s9 = scalar_select 0, %s8, %s6
  $region1: #{projection_layer.2} parent=0
    #allocation4 [shape = 'u8[8192]{0}', space=vmem, size = 0x2000, scoped, tag = 'input window, operand 0']
    #allocation5 [shape = 's32[2]{0}', space=sflag, size = 0x8, scoped, tag = 'scoped memory for projection_layer.2']
    #allocation6 [shape = 'u8[32768]{0}', space=vmem, size = 0x8000, scoped, tag = 'input window, operand 1']
    #allocation7 [shape = 's32[2]{0}', space=sflag, size = 0x8, scoped, tag = 'scoped memory for projection_layer.2']
    #allocation8 [shape = 'u8[1024]{0}', space=vmem, size = 0x400, scoped, tag = 'input window, operand 2']
    %10 = vsyncpa [#allocation5], 0
    %s11 = scalar_lea.sflag [#allocation5], 1
    %12 = vsyncpa %s11, 0
    %13 = vsyncpa [#allocation7], 0
    %s14 = scalar_lea.sflag [#allocation7], 1
    %15 = vsyncpa %s14, 0
    loop: start=0, step=1, limit=10
    $region2: #{projection_layer.2} parent=1 // loop_pre_header
      _
    $region3: #{projection_layer.2} parent=1 // loop_header
      %s17 = sphi 0, %s21
      %p18 = scmp.ge.s32.totalorder %s17, 10
      %s24 = sphi 0, %s36
      %s25 = sphi 0, %s32
      %s26 = sphi 0, %s24
      %s27 = sphi 0, %s25
      %s28 = sphi 0, %s26
      %s29 = sphi 0, %s27
      %s39 = sphi 0, %s41
      %s42 = sphi 0, %s39
      %s43 = sphi 0, %s42
      %s59 = sphi 0, %s43
      %s65 = sphi 0, %s67
      %s68 = sphi 0, %s65
      %s69 = sphi 0, %s68
      %s85 = sphi 0, %s69
      %s91 = sphi 0, %s93
      %s94 = sphi 0, %s91
      %s95 = sphi 0, %s94
      %s111 = sphi 0, %s95
      %s119 = sphi 0, %s121
      %s122 = sphi 0, %s119
      %s123 = sphi 0, %s122
      %s139 = sphi 0, %s123
      %s145 = sphi 0, %s147
      %s148 = sphi 0, %s145
      %s149 = sphi 0, %s148
      %s165 = sphi 0, %s149
    $region4: #{projection_layer.2} parent=1 // loop_header_branch
      %20 = sbr.rel (%p18) target = $region8
    $region5: #{projection_layer.2} parent=1 // loop_body
      %s22 = ssub.s32 %s17, 1
      %s23 = ssub.s32 %s17, 2
      %s30 = sadd.s32 1, %s25
      %p31 = scmp.ge.s32.totalorder %s30, 4
      %s32 = scalar_select %p31, 0, %s30
      %s33 = sadd.s32 1, %s24
      %s34 = scalar_select %p31, %s33, %s24
      %p35 = scmp.ge.s32.totalorder %s34, 2
      %s36 = scalar_select %p35, 0, %s34
      %s37 = ssub.s32 %s24, %s36
      %p38 = scmp.eq.s32.totalorder %s37, 0
      %s40 = sadd.s32 %s39, 1
      %s41 = scalar_select %p38, %s39, %s40
      %p44 = pneg %p38
      %p45 = scmp.eq.s32.totalorder %s17, 7
      %p46 = por %p44, %p45
      %p47 = scmp.ne.s32.totalorder %s39, %s42
      %p48 = scmp.eq.s32.totalorder %s17, 0
      %p49 = por %p47, %p48
      %p50 = scmp.ne.s32.totalorder %s39, %s42
      %p51 = scmp.eq.s32.totalorder %s22, 7
      %p52 = por %p50, %p51
      %p53 = scmp.ne.s32.totalorder %s42, %s43
      %p54 = scmp.eq.s32.totalorder %s22, 0
      %p55 = por %p53, %p54
      %p56 = scmp.ne.s32.totalorder %s42, %s43
      %p57 = scmp.eq.s32.totalorder %s23, 7
      %p58 = por %p56, %p57
      %p60 = scmp.ne.s32.totalorder %s43, %s59
      %p61 = scmp.eq.s32.totalorder %s23, 0
      %p62 = por %p60, %p61
      %s63 = ssub.s32 %s25, %s32
      %p64 = scmp.eq.s32.totalorder %s63, 0
      %s66 = sadd.s32 %s65, 1
      %s67 = scalar_select %p64, %s65, %s66
      %p70 = pneg %p64
      %p71 = scmp.eq.s32.totalorder %s17, 7
      %p72 = por %p70, %p71
      %p73 = scmp.ne.s32.totalorder %s65, %s68
      %p74 = scmp.eq.s32.totalorder %s17, 0
      %p75 = por %p73, %p74
      %p76 = scmp.ne.s32.totalorder %s65, %s68
      %p77 = scmp.eq.s32.totalorder %s22, 7
      %p78 = por %p76, %p77
      %p79 = scmp.ne.s32.totalorder %s68, %s69
      %p80 = scmp.eq.s32.totalorder %s22, 0
      %p81 = por %p79, %p80
      %p82 = scmp.ne.s32.totalorder %s68, %s69
      %p83 = scmp.eq.s32.totalorder %s23, 7
      %p84 = por %p82, %p83
      %p86 = scmp.ne.s32.totalorder %s69, %s85
      %p87 = scmp.eq.s32.totalorder %s23, 0
      %p88 = por %p86, %p87
      %s89 = ssub.s32 %s25, %s32
      %p90 = scmp.eq.s32.totalorder %s89, 0
      %s92 = sadd.s32 %s91, 1
      %s93 = scalar_select %p90, %s91, %s92
      %p96 = pneg %p90
      %p97 = scmp.eq.s32.totalorder %s17, 7
      %p98 = por %p96, %p97
      %p99 = scmp.ne.s32.totalorder %s91, %s94
      %p100 = scmp.eq.s32.totalorder %s17, 0
      %p101 = por %p99, %p100
      %p102 = scmp.ne.s32.totalorder %s91, %s94
      %p103 = scmp.eq.s32.totalorder %s22, 7
      %p104 = por %p102, %p103
      %p105 = scmp.ne.s32.totalorder %s94, %s95
      %p106 = scmp.eq.s32.totalorder %s22, 0
      %p107 = por %p105, %p106
      %p108 = scmp.ne.s32.totalorder %s94, %s95
      %p109 = scmp.eq.s32.totalorder %s23, 7
      %p110 = por %p108, %p109
      %p112 = scmp.ne.s32.totalorder %s95, %s111
      %p113 = scmp.eq.s32.totalorder %s23, 0
      %p114 = por %p112, %p113
      %s115 = ssub.s32 %s24, %s36
      %s116 = ssub.s32 %s25, %s32
      %s117 = sor.u32 %s115, %s116
      %p118 = scmp.eq.s32.totalorder %s117, 0
      %s120 = sadd.s32 %s119, 1
      %s121 = scalar_select %p118, %s119, %s120
      %p124 = pneg %p118
      %p125 = scmp.eq.s32.totalorder %s17, 7
      %p126 = por %p124, %p125
      %p127 = scmp.ne.s32.totalorder %s119, %s122
      %p128 = scmp.eq.s32.totalorder %s17, 0
      %p129 = por %p127, %p128
      %p130 = scmp.ne.s32.totalorder %s119, %s122
      %p131 = scmp.eq.s32.totalorder %s22, 7
      %p132 = por %p130, %p131
      %p133 = scmp.ne.s32.totalorder %s122, %s123
      %p134 = scmp.eq.s32.totalorder %s22, 0
      %p135 = por %p133, %p134
      %p136 = scmp.ne.s32.totalorder %s122, %s123
      %p137 = scmp.eq.s32.totalorder %s23, 7
      %p138 = por %p136, %p137
      %p140 = scmp.ne.s32.totalorder %s123, %s139
      %p141 = scmp.eq.s32.totalorder %s23, 0
      %p142 = por %p140, %p141
      %s143 = ssub.s32 %s24, %s36
      %p144 = scmp.eq.s32.totalorder %s143, 0
      %s146 = sadd.s32 %s145, 1
      %s147 = scalar_select %p144, %s145, %s146
      %p150 = pneg %p144
      %p151 = scmp.eq.s32.totalorder %s17, 7
      %p152 = por %p150, %p151
      %p153 = scmp.ne.s32.totalorder %s145, %s148
      %p154 = scmp.eq.s32.totalorder %s17, 0
      %p155 = por %p153, %p154
      %p156 = scmp.ne.s32.totalorder %s145, %s148
      %p157 = scmp.eq.s32.totalorder %s22, 7
      %p158 = por %p156, %p157
      %p159 = scmp.ne.s32.totalorder %s148, %s149
      %p160 = scmp.eq.s32.totalorder %s22, 0
      %p161 = por %p159, %p160
      %p162 = scmp.ne.s32.totalorder %s148, %s149
      %p163 = scmp.eq.s32.totalorder %s23, 7
      %p164 = por %p162, %p163
      %p166 = scmp.ne.s32.totalorder %s149, %s165
      %p167 = scmp.eq.s32.totalorder %s23, 0
      %p168 = por %p166, %p167
      %p169 = scmp.le.s32.totalorder 1, %s17
      %p170 = scmp.lt.s32.totalorder %s17, 9
      %p171 = pnand %p169, %p170
      %p172 = pneg %p171
      // Predicated region
      $region9: #{projection_layer.2} parent=5 // pred_check
        _
      $region10: #{projection_layer.2} parent=5 // pred_check_branch
        %174 = sbr.rel (%p171) target = $region12
      $region11: #{projection_layer.2} parent=5 // pred_region
        %s175 = ssub.s32 %s17, 1
      $region12: #{projection_layer.2} parent=5 // pred_fallthru
        _
      %p176 = scmp.lt.s32.totalorder %s17, 8
      // Predicated region
      $region13: #{projection_layer.2} parent=5 // pred_check
        %p177 = pneg %p176
      $region14: #{projection_layer.2} parent=5 // pred_check_branch
        %179 = sbr.rel (%p177) target = $region16
      $region15: #{projection_layer.2} parent=5 // pred_region
        // Predicated region
        $region17: #{projection_layer.2} parent=15 // pred_check
          %p180 = pneg %p49
        $region18: #{projection_layer.2} parent=15 // pred_check_branch
          %182 = sbr.rel (%p180) target = $region20
        $region19: #{projection_layer.2} parent=15 // pred_region
          %s183 = sand.u32 %s39, 1
          %s184 = scalar_lea.sflag [#allocation5], %s183
          %s185 = sand.u32 %s39, 1
          %s186 = smul.addr %s185, 8
          %s187 = scalar_lea.vmem [#allocation4], %s186
          %189 = vsyncadd %s184, 0
          %s190 = smul.addr %s24, 8
          %s191 = scalar_lea.hbm %s0, %s190
          %s193 = sshll.u32 %s191, 4
          %s194 = int_to_ptr.hbm [resolvable:$true] %s193
          %s195 = sshll.u32 %s187, 4
          %s196 = int_to_ptr.vmem [resolvable:$true] %s195
          %198 = dma.hbm_to_vmem [thread:$0]  %s194, 128, %s196, %s184
        $region20: #{projection_layer.2} parent=15 // pred_fallthru
          _
        // Predicated region
        $region21: #{projection_layer.2} parent=15 // pred_check
          %p199 = pneg %p75
        $region22: #{projection_layer.2} parent=15 // pred_check_branch
          %201 = sbr.rel (%p199) target = $region24
        $region23: #{projection_layer.2} parent=15 // pred_region
          %s202 = sand.u32 %s17, 1
          %s203 = scalar_lea.sflag [#allocation7], %s202
          %s204 = sand.u32 %s65, 1
          %s205 = smul.addr %s204, 32
          %s206 = scalar_lea.vmem [#allocation6], %s205
          %208 = vsyncadd %s203, 0
          %s209 = smul.addr %s25, 8
          %s210 = scalar_lea.hbm %s1, %s209
          %s211 = sshll.u32 %s210, 4
          %s212 = int_to_ptr.hbm [resolvable:$true] %s211
          %s213 = sshll.u32 %s206, 4
          %s214 = int_to_ptr.vmem [resolvable:$true] %s213
          %219 = dma.hbm_to_vmem [thread:$0]  %s212, 512, %s214, %s203, 512, 128, 8
        $region24: #{projection_layer.2} parent=15 // pred_fallthru
          _
        // Predicated region
        $region25: #{projection_layer.2} parent=15 // pred_check
          %p220 = pneg %p101
        $region26: #{projection_layer.2} parent=15 // pred_check_branch
          %222 = sbr.rel (%p220) target = $region28
        $region27: #{projection_layer.2} parent=15 // pred_region
          %s223 = sand.u32 %s17, 1
          %s224 = scalar_lea.sflag [#allocation7], %s223
          %s225 = sand.u32 %s91, 1
          %s226 = scalar_lea.vmem [#allocation8], %s225
          %228 = vsyncadd %s224, 0
          %s229 = scalar_lea.hbm %s2, %s25
          %s231 = sshll.u32 %s229, 4
          %s232 = int_to_ptr.hbm [resolvable:$true] %s231
          %s233 = sshll.u32 %s226, 4
          %s234 = int_to_ptr.vmem [resolvable:$true] %s233
          %236 = dma.hbm_to_vmem [thread:$0]  %s232, 16, %s234, %s224
        $region28: #{projection_layer.2} parent=15 // pred_fallthru
          _
      $region16: #{projection_layer.2} parent=5 // pred_fallthru
        _
      %p237 = scmp.le.s32.totalorder 1, %s17
      %p238 = scmp.lt.s32.totalorder %s17, 9
      %p239 = pnand %p237, %p238
      %p240 = pneg %p239
      // Predicated region
      $region29: #{projection_layer.2} parent=5 // pred_check
        _
      $region30: #{projection_layer.2} parent=5 // pred_check_branch
        %242 = sbr.rel (%p239) target = $region32
      $region31: #{projection_layer.2} parent=5 // pred_region
        %s243 = ssub.s32 %s17, 1
        %s244 = sand.u32 %s42, 1
        %s245 = scalar_lea.sflag [#allocation5], %s244
        %s246 = sand.u32 %s42, 1
        %s247 = smul.addr %s246, 8
        %s248 = scalar_lea.vmem [#allocation4], %s247
        // Predicated region
        $region33: #{projection_layer.2} parent=31 // pred_check
          %p249 = pneg %p55
        $region34: #{projection_layer.2} parent=31 // pred_check_branch
          %251 = sbr.rel (%p249) target = $region36
        $region35: #{projection_layer.2} parent=31 // pred_region
          %253 = dma.done %s245, 128
        $region36: #{projection_layer.2} parent=31 // pred_fallthru
          _
        %s254 = sand.u32 %s22, 1
        %s255 = scalar_lea.sflag [#allocation7], %s254
        %s256 = sand.u32 %s68, 1
        %s257 = smul.addr %s256, 32
        %s258 = scalar_lea.vmem [#allocation6], %s257
        // Predicated region
        $region37: #{projection_layer.2} parent=31 // pred_check
          %p259 = pneg %p81
        $region38: #{projection_layer.2} parent=31 // pred_check_branch
          %261 = sbr.rel (%p259) target = $region40
        $region39: #{projection_layer.2} parent=31 // pred_region
          %263 = dma.done %s255, 512
        $region40: #{projection_layer.2} parent=31 // pred_fallthru
          _
        %s264 = sand.u32 %s22, 1
        %s265 = scalar_lea.sflag [#allocation7], %s264
        %s266 = sand.u32 %s94, 1
        %s267 = scalar_lea.vmem [#allocation8], %s266
        // Predicated region
        $region41: #{projection_layer.2} parent=31 // pred_check
          %p268 = pneg %p107
        $region42: #{projection_layer.2} parent=31 // pred_check_branch
          %270 = sbr.rel (%p268) target = $region44
        $region43: #{projection_layer.2} parent=31 // pred_region
          %272 = dma.done %s265, 16
        $region44: #{projection_layer.2} parent=31 // pred_fallthru
          _
        %s273 = sand.u32 %s42, 1
        %s274 = scalar_lea.sflag [#allocation5], %s273
        %s275 = sand.u32 %s42, 1
        %s276 = smul.addr %s275, 8
        %s277 = scalar_lea.vmem [#allocation4], %s276
        %p278 = pneg %p55
        %p279 = pneg %p52
        %s280 = sand.u32 %s22, 1
        %s281 = scalar_lea.sflag [#allocation7], %s280
        %s282 = sand.u32 %s68, 1
        %s283 = smul.addr %s282, 32
        %s284 = scalar_lea.vmem [#allocation6], %s283
        %p285 = pneg %p81
        %p286 = pneg %p78
        %s287 = sand.u32 %s22, 1
        %s288 = scalar_lea.sflag [#allocation7], %s287
        %s289 = sand.u32 %s94, 1
        %s290 = scalar_lea.vmem [#allocation8], %s289
        %p291 = pneg %p107
        %p292 = pneg %p104
        %p293 = pneg %p135
        %p294 = pneg %p132
        %p295 = scmp.lt.s32.totalorder %s26, 1
        %s296 = scalar_select %p295, %s26, 1
        %p297 = scmp.lt.s32.totalorder %s27, 3
        %s298 = scalar_select %p297, %s27, 3
        %s299 = smul.addr %s296, 4
        %s300 = sadd.s32 %s298, %s299
        %s301 = smul.addr %s300, 8
        %s302 = scalar_lea.vmem %s3, %s301
        %p303 = pneg %p161
        %p304 = pneg %p158
        %p305 = scmp.lt.s32.totalorder %s26, 1
        %s306 = scalar_select %p305, %s26, 1
        %s307 = smul.addr %s306, 8
        %s308 = scalar_lea.vmem %s4, %s307
        %p309 = scmp.lt.s32.totalorder %s26, 1
        %s310 = scalar_select %p309, %s26, 1
        %p311 = scmp.lt.s32.totalorder %s27, 3
        %s312 = scalar_select %p311, %s27, 3
        %s313 = smul.addr %s310, 4
        %s314 = sadd.s32 %s312, %s313
        %s315 = smul.addr %s314, 8
        %s316 = scalar_lea.vmem %s3, %s315
        %p317 = scmp.lt.s32.totalorder %s26, 1
        %s318 = scalar_select %p317, %s26, 1
        %s319 = smul.addr %s318, 8
        %s320 = scalar_lea.vmem %s4, %s319
        %p321 = scmp.eq.s32.totalorder %s27, 0
        // Predicated region
        $region45: #{projection_layer.2} parent=31 // pred_check
          %p322 = pneg %p321
        $region46: #{projection_layer.2} parent=31 // pred_check_branch
          %324 = sbr.rel (%p322) target = $region48
        $region47: #{projection_layer.2} parent=31 // pred_region
          %vm325 = vcmask 7168
          %326 = vst.msk [vmem:[#allocation2] sm:$0xff] %vm325, -inf
          %327 = vst.msk [vmem:[#allocation3] sm:$0xff] %vm325, 0.0
        $region48: #{projection_layer.2} parent=31 // pred_fallthru
          _
        %v328 = vld [vmem:[%s248] sm:$0xff]
        %v329 = vld [vmem:[%s258] sm:$0xff]
        %v330 = vld [vmem:[%s258 + $0x8] sm:$0xff]
        %v331 = vld [vmem:[%s258 + $0x10] sm:$0xff]
        %v332 = vld [vmem:[%s258 + $0x18] sm:$0xff]
        %v333 = vld [vmem:[%s267] sm:$0x1]
        %v335 = vperm.slane %v333, 0
        %vm337 = vcmask 261120
        %v339 = vsel %vm337, %v328, 0
        %341 = vmatpush.msra.mxu0 0.0
        %342 = vmatpush.msra.mxu0 0.0
        %343 = vmatpush.msra.mxu0 0.0
        %344 = vmatpush.msra.mxu0 0.0
        %345 = vmatpush.msra.mxu0 0.0
        %346 = vmatpush.msra.mxu0 0.0
        %347 = vmatpush.msra.mxu0 0.0
        %348 = vmatpush.msra.mxu0 0.0
        %349 = vmatpush.msra.mxu0 0.0
        %350 = vmatpush.msra.mxu0 0.0
        %351 = vmatpush.msra.mxu0 0.0
        %352 = vmatpush.msra.mxu0 0.0
        %353 = vmatpush.msra.mxu0 %v332
        %354 = vmatpush.msra.mxu0 %v331
        %355 = vmatpush.msra.mxu0 %v330
        %356 = vmatpush.msra.mxu0 %v329
        %357 = vmatmul.f32.gmra.mxu0 %v339
        %v358 = vpop.f32.mrf.mxu0
        %v359 = vadd.f32 %v335, %v358
        %360 = vdwg.mxu0
        %v361 = vld [vmem:[#allocation2] sm:$0xff]
        %362 = vmax.xlane.f32.xlu0 %v359
        %v363 = vpop.xlane.xlu0 %362
        %v364 = vmax.f32 %v361, %v363
        %v365 = vsub.f32 %v361, %v364
        %v366 = vmul.f32 %v365, 1.442695
        %v367 = vpow.pop %v366
        %v368 = vld [vmem:[#allocation3] sm:$0xff]
        %v369 = vmul.f32 %v367, %v368
        %371 = vset.pattern.permute.xlu0 0
        %372 = vperm.xlu0 %371, %v364
        %v373 = vpop.permute.xlu0 %372
        %v375 = vsub.f32 %v359, %v373
        %v376 = vmul.f32 %v375, 1.442695
        %v377 = vpow.pop %v376
        %378 = vadd.xlane.f32.xlu0 %v377
        %v379 = vpop.xlane.xlu0 %378
        %v380 = vadd.f32 %v369, %v379
        %vm381 = vcmask 7168
        %382 = vst.msk [vmem:[#allocation3] sm:$0xff] %vm381, %v380
        %383 = vst.msk [vmem:[#allocation2] sm:$0xff] %vm381, %v364
        %384 = vst [vmem:[%s316] sm:$0xff] %v359
        %p385 = scmp.eq.s32.totalorder %s27, 3
        // Predicated region
        $region49: #{projection_layer.2} parent=31 // pred_check
          %p386 = pneg %p385
        $region50: #{projection_layer.2} parent=31 // pred_check_branch
          %388 = sbr.rel (%p386) target = $region52
        $region51: #{projection_layer.2} parent=31 // pred_region
          %v389 = vld [vmem:[#allocation2] sm:$0xff]
          %v390 = vld [vmem:[#allocation3] sm:$0xff]
          %v391 = vlog2.pop %v390
          %v392 = vmul.f32 %v391, 0.6931472
          %v393 = vadd.f32 %v389, %v392
          %394 = vst.msk [vmem:[%s320] sm:$0xff] %vm381, %v393
        $region52: #{projection_layer.2} parent=31 // pred_fallthru
          _
        %p395 = scmp.lt.s32.totalorder %s26, 1
        %s396 = scalar_select %p395, %s26, 1
        %p397 = scmp.lt.s32.totalorder %s27, 3
        %s398 = scalar_select %p397, %s27, 3
        %s399 = smul.addr %s396, 4
        %s400 = sadd.s32 %s398, %s399
        %s401 = smul.addr %s400, 8
        %s402 = scalar_lea.vmem %s3, %s401
        %p403 = scmp.lt.s32.totalorder %s26, 1
        %s404 = scalar_select %p403, %s26, 1
        %s405 = smul.addr %s404, 8
        %s406 = scalar_lea.vmem %s4, %s405
        // Predicated region
        $region53: #{projection_layer.2} parent=31 // pred_check
          %p407 = pneg %p132
        $region54: #{projection_layer.2} parent=31 // pred_check_branch
          %409 = sbr.rel (%p407) target = $region56
        $region55: #{projection_layer.2} parent=31 // pred_region
          _
        $region56: #{projection_layer.2} parent=31 // pred_fallthru
          _
        // Predicated region
        $region57: #{projection_layer.2} parent=31 // pred_check
          %p410 = pneg %p158
        $region58: #{projection_layer.2} parent=31 // pred_check_branch
          %412 = sbr.rel (%p410) target = $region60
        $region59: #{projection_layer.2} parent=31 // pred_region
          _
        $region60: #{projection_layer.2} parent=31 // pred_fallthru
          _
      $region32: #{projection_layer.2} parent=5 // pred_fallthru
        _
      %p413 = scmp.le.s32.totalorder 2, %s17
      // Predicated region
      $region61: #{projection_layer.2} parent=5 // pred_check
        %p414 = pneg %p413
      $region62: #{projection_layer.2} parent=5 // pred_check_branch
        %416 = sbr.rel (%p414) target = $region64
      $region63: #{projection_layer.2} parent=5 // pred_region
        %s417 = ssub.s32 %s17, 2
        // Predicated region
        $region65: #{projection_layer.2} parent=63 // pred_check
          %p418 = pneg %p138
        $region66: #{projection_layer.2} parent=63 // pred_check_branch
          %420 = sbr.rel (%p418) target = $region68
        $region67: #{projection_layer.2} parent=63 // pred_region
          %p421 = scmp.lt.s32.totalorder %s28, 1
          %s422 = scalar_select %p421, %s28, 1
          %p423 = scmp.lt.s32.totalorder %s29, 3
          %s424 = scalar_select %p423, %s29, 3
          %s425 = smul.addr %s422, 4
          %s426 = sadd.s32 %s424, %s425
          %s427 = smul.addr %s426, 8
          %s428 = scalar_lea.vmem %s3, %s427
        $region68: #{projection_layer.2} parent=63 // pred_fallthru
          _
        // Predicated region
        $region69: #{projection_layer.2} parent=63 // pred_check
          %p429 = pneg %p164
        $region70: #{projection_layer.2} parent=63 // pred_check_branch
          %431 = sbr.rel (%p429) target = $region72
        $region71: #{projection_layer.2} parent=63 // pred_region
          %p432 = scmp.lt.s32.totalorder %s28, 1
          %s433 = scalar_select %p432, %s28, 1
          %s434 = smul.addr %s433, 8
          %s435 = scalar_lea.vmem %s4, %s434
        $region72: #{projection_layer.2} parent=63 // pred_fallthru
          _
      $region64: #{projection_layer.2} parent=5 // pred_fallthru
        _
    $region6: #{projection_layer.2} parent=1 // loop_footer
      %s21 = sadd.s32 1, %s17
    $region7: #{projection_layer.2} parent=1 // loop_footer_branch
      %16 = sbr.rel target = $region3
    $region8: #{projection_layer.2} parent=1 // loop_exit
      _
    %436 = vsyncpa [#allocation5], 1
    %s437 = scalar_lea.sflag [#allocation5], 1
    %438 = vsyncpa %s437, 1
    %439 = vsyncpa [#allocation7], 1
    %s440 = scalar_lea.sflag [#allocation7], 1
    %441 = vsyncpa %s440, 1

// kernel: projection_layer.3
$region0: #{projection_layer.3}
  #allocation0 [shape = 'u32[]', space=smem, size = 0x4, offset = 0x4, fixed_abs, tag = 'smem constant byte address 0x4 - core index']
  #allocation1 [shape = 'u32[72,128]{1,0:T(1,128)}', space=vmem, size = 0x9000, scoped, tag = 'internal scratch']
  %s0 = inlined_call_operand.vmem [shape: f32[16,512], index: 0, kind: input, shape index: {}, may-alias: {0,2}]
  %s1 = inlined_call_operand.vmem [shape: f32[16,1], index: 1, kind: input, shape index: {}]
  %s2 = inlined_call_operand.vmem [shape: f32[16,512], index: 2, kind: output, shape index: {}, may-alias: {0,2}]
  %s3 = sld [smem:[#allocation0]]
  $region18: #{projection_layer.3} parent=0
    _
  %s5 = ssub.s32 1, %s3
  %s6 = scalar_select 0, %s5, %s3
  // Predicated region
  $region2: #{projection_layer.3} parent=0 // pred_check
    _
  $region3: #{projection_layer.3} parent=0 // pred_check_branch
    %8 = sbr.rel (0) target = $region5
  $region4: #{projection_layer.3} parent=0 // pred_region
    _
  $region5: #{projection_layer.3} parent=0 // pred_fallthru
    _
  // Predicated region
  $region6: #{projection_layer.3} parent=0 // pred_check
    _
  $region7: #{projection_layer.3} parent=0 // pred_check_branch
    %10 = sbr.rel (0) target = $region9
  $region8: #{projection_layer.3} parent=0 // pred_region
    _
  $region9: #{projection_layer.3} parent=0 // pred_fallthru
    _
  %v11 = vld [vmem:[%s0] sm:$0xff]
  %v12 = vld [vmem:[%s0 + $0x8] sm:$0xff]
  %v13 = vld [vmem:[%s0 + $0x10] sm:$0xff]
  %v14 = vld [vmem:[%s0 + $0x18] sm:$0xff]
  %v15 = vld [vmem:[%s0 + $0x20] sm:$0xff]
  %v16 = vld [vmem:[%s0 + $0x28] sm:$0xff]
  %v17 = vld [vmem:[%s0 + $0x30] sm:$0xff]
  %v18 = vld [vmem:[%s0 + $0x38] sm:$0xff]
  %v19 = vld [vmem:[%s1] sm:$0xff]
  %v20 = vld [vmem:[%s1 + $0x8] sm:$0xff]
  %22 = vset.pattern.permute.xlu0 0
  %23 = vperm.xlu0 %22, %v19
  %v24 = vpop.permute.xlu0 %23
  %27 = vset.pattern.permute.xlu0 0
  %28 = vperm.xlu0 %27, %v20
  %v29 = vpop.permute.xlu0 %28
  %v31 = vsub.f32 %v11, %v24
  %v32 = vsub.f32 %v12, %v24
  %v33 = vsub.f32 %v13, %v24
  %v34 = vsub.f32 %v14, %v24
  %v35 = vsub.f32 %v15, %v29
  %v36 = vsub.f32 %v16, %v29
  %v37 = vsub.f32 %v17, %v29
  %v38 = vsub.f32 %v18, %v29
  %39 = vst [vmem:[%s2] sm:$0xff] %v31
  %40 = vst [vmem:[%s2 + $0x8] sm:$0xff] %v32
  %41 = vst [vmem:[%s2 + $0x10] sm:$0xff] %v33
  %42 = vst [vmem:[%s2 + $0x18] sm:$0xff] %v34
  %43 = vst [vmem:[%s2 + $0x20] sm:$0xff] %v35
  %44 = vst [vmem:[%s2 + $0x28] sm:$0xff] %v36
  %45 = vst [vmem:[%s2 + $0x30] sm:$0xff] %v37
  %46 = vst [vmem:[%s2 + $0x38] sm:$0xff] %v38
  // Predicated region
  $region10: #{projection_layer.3} parent=0 // pred_check
    _
  $region11: #{projection_layer.3} parent=0 // pred_check_branch
    %48 = sbr.rel (0) target = $region13
  $region12: #{projection_layer.3} parent=0 // pred_region
    _
  $region13: #{projection_layer.3} parent=0 // pred_fallthru
    _
  // Predicated region
  $region14: #{projection_layer.3} parent=0 // pred_check
    _
  $region15: #{projection_layer.3} parent=0 // pred_check_branch
    %50 = sbr.rel (0) target = $region17
  $region16: #{projection_layer.3} parent=0 // pred_region
    _
  $region17: #{projection_layer.3} parent=0 // pred_fallthru
    _

</llo_original>
